<compile_context>
chip_gen: v6e
topology: v6e:2x2x1
jax: 0.10.0
libtpu: 0.0.40
codegen_flags: <defaults>
</compile_context>

<pallas_src>
import functools

import jax
import jax.numpy as jnp
from jax import lax
from jax.experimental import pallas as pl
from jax.experimental.pallas import tpu as pltpu


# --------------------------------------------------------------------------
# Helpers
# --------------------------------------------------------------------------
def _gamma_threshold(w, block_size, p):
    """gamma per the module's calculate_gamma, as a threshold on 31 random bits."""
    invalid = (1.0 - p) / (block_size ** 2)
    valid = (w ** 2) / ((w - block_size + 1) ** 2)
    gamma = invalid * valid
    gamma = min(max(gamma, 0.0), 1.0)
    return min(int(gamma * 2147483648.0), 2147483647)


def _vmem_budget_bytes():
    """Generation-aware scoped-VMEM limit (v5e/v6e: 128 MiB phys -> 96 MiB;
    v7x: 64 MiB per-TC -> 48 MiB).  Falls back to the conservative v7x number
    when hardware info is unavailable (e.g. interpret mode)."""
    try:
        cap = int(getattr(pltpu.get_tpu_info(), "vmem_capacity_bytes",
                          64 * 1024 * 1024))
    except Exception:  # no TPU / interpret mode
        cap = 64 * 1024 * 1024
    return max(32 * 1024 * 1024, min((cap * 3) // 4, 100 * 1024 * 1024))


def _pick_nc_block(nc, h, w, block_size, itemsize, vmem_limit):
    """Largest divisor of N*C whose per-tile footprint fits the VMEM budget,
    while keeping >= ~8 grid steps (megacore sharding + pipeline overlap on
    v7x) and exact f32 sums of 0/1 values (< 2^24 elements per tile)."""
    hp = h + block_size - 1
    wp = w + block_size - 1
    sub_pad = ((hp + 7) // 8) * 8
    lane_pad = ((wp + 127) // 128) * 128
    stream = h * w * itemsize                       # x / out, per plane
    mask_tmp = 4 * sub_pad * lane_pad * 4           # ~4 f32 padded temporaries
    per_plane = 2 * 2 * stream + mask_tmp           # 2 streams, double-buffered
    budget = int(vmem_limit * 0.6)
    cap = max(1, budget // max(per_plane, 1))
    cap = min(cap, (1 << 24) // max(h * w, 1))      # exact f32 0/1 tile sums
    if nc >= 8:
        cap = min(cap, max(1, nc // 8))             # keep >= 8 grid steps
    divs = sorted((d for d in range(1, nc + 1) if nc % d == 0 and d <= cap),
                  reverse=True)
    if not divs:
        return 1
    best = divs[0]
    for d in divs:                                  # prefer an even grid count
        if (nc // d) % 2 == 0 and 2 * d >= best:
            return d
    return best


# --------------------------------------------------------------------------
# In-kernel mask generation (pure jnp/lax -> lowers on TPU and interpret/CPU)
# --------------------------------------------------------------------------
def _mix32(x):
    """splitmix32-style finalizer on uint32 (logical shifts, wrapping muls)."""
    x = x ^ (x >> 16)
    x = x * jnp.uint32(0x7FEB352D)
    x = x ^ (x >> 15)
    x = x * jnp.uint32(0x846CA68B)
    x = x ^ (x >> 16)
    return x


def _gen_mask_block(seed, tile_idx, *, nc_blk, h, w, block_size, thresh):
    """Per-tile padded Bernoulli mask (bool) and mask_block = 1 - maxpool_bs.

    Returns:
      keep_pad   : (nc_blk, h+bs-1, w+bs-1) bool, zero-padded Bernoulli mask
      mask_block : (nc_blk, h, w)           f32,  1 - (bs x bs, stride 1) pool
    """
    hp = h + block_size - 1
    wp = w + block_size - 1
    off = block_size - 1
    h_in = h - block_size + 1
    w_in = w - block_size + 1

    # 2-D halo predicate / spatial key, hoisted once per tile (cheap vs 3-D).
    row2 = lax.broadcasted_iota(jnp.int32, (hp, wp), 0)
    col2 = lax.broadcasted_iota(jnp.int32, (hp, wp), 1)
    inb2 = ((row2 >= off) & (row2 < off + h_in) &
            (col2 >= off) & (col2 < off + w_in))
    key2 = (row2 * wp + col2).astype(jnp.uint32)

    # Global, tiling-independent per-element key: plane * (hp*wp) + row*wp+col.
    plane = (lax.broadcasted_iota(jnp.int32, (nc_blk, hp, wp), 0)
             + tile_idx * nc_blk)
    key = plane.astype(jnp.uint32) * jnp.uint32(hp * wp) + key2[None, :, :]

    # Counter-based hash -> 31 uniform bits -> Bernoulli(gamma).
    # TODO(synk): not bit-identical to torch.bernoulli's RNG stream.
    seed_u = seed.astype(jnp.uint32)
    x = _mix32(key ^ (seed_u * jnp.uint32(0x9E3779B9)))
    x = _mix32(x + seed_u)
    r = (x >> 1).astype(jnp.int32)                    # in [0, 2^31)
    keep_pad = (r < jnp.int32(thresh)) & inb2[None, :, :]

    # Separable bs x bs stride-1 VALID max-pool on {0,1} == boolean OR-pool.
    rowor = keep_pad[:, :, 0:w]
    for dj in range(1, block_size):
        rowor = rowor | keep_pad[:, :, dj:dj + w]
    pooled = rowor[:, 0:h, :]
    for di in range(1, block_size):
        pooled = pooled | rowor[:, di:di + h, :]
    mask_block = jnp.where(pooled, jnp.float32(0.0), jnp.float32(1.0))
    return keep_pad, mask_block


# --------------------------------------------------------------------------
# Kernels
# --------------------------------------------------------------------------
def _mask_sum_kernel(seed_ref, psum_ref, *, nc_blk, h, w, block_size, thresh):
    """Pass 1: regenerate-able mask -> emit only the per-tile partial sum."""
    i = pl.program_id(0)
    _, mb = _gen_mask_block(seed_ref[0], i, nc_blk=nc_blk, h=h, w=w,
                            block_size=block_size, thresh=thresh)
    psum_ref[...] = jnp.full(psum_ref.shape, jnp.sum(mb), dtype=psum_ref.dtype)


def _apply_kernel(seed_ref, scale_ref, x_ref, o_ref, *,
                  nc_blk, h, w, block_size, thresh):
    """Pass 2: regenerate the same mask in-kernel; out = mask_block * x * scale.
    Compute in f32 (required on v5e; free filler under HBM-bound on v6e/v7x)."""
    i = pl.program_id(0)
    _, mb = _gen_mask_block(seed_ref[0], i, nc_blk=nc_blk, h=h, w=w,
                            block_size=block_size, thresh=thresh)
    out = mb * x_ref[...].astype(jnp.float32) * scale_ref[0]
    o_ref[...] = out.astype(o_ref.dtype)


def _mask_dump_kernel(seed_ref, mpad_ref, mb_ref, *,
                      nc_blk, h, w, block_size, thresh):
    """Debug/validation kernel: dump the padded Bernoulli mask and mask_block."""
    i = pl.program_id(0)
    keep_pad, mb = _gen_mask_block(seed_ref[0], i, nc_blk=nc_blk, h=h, w=w,
                                   block_size=block_size, thresh=thresh)
    mpad_ref[...] = keep_pad.astype(mpad_ref.dtype)
    mb_ref[...] = mb.astype(mb_ref.dtype)


# --------------------------------------------------------------------------
# Wrappers
# --------------------------------------------------------------------------
def dropblock_forward(x, seed, block_size=5, p=0.1, training=True,
                      nc_block=None, donate_x=False):
    """DropBlock forward. x is NCHW; seed is an int32 scalar."""
    if not training:
        return x
    if block_size % 2 != 1:
        raise ValueError("odd block_size assumed (module default bs=5)")
    n, c, h, w = x.shape
    if h < block_size or w < block_size:
        raise ValueError("spatial dims must be >= block_size")
    nc = n * c
    hp = h + block_size - 1
    wp = w + block_size - 1
    thresh = _gamma_threshold(w, block_size, p)

    vmem_limit = _vmem_budget_bytes()
    nc_blk = (nc_block if nc_block is not None
              else _pick_nc_block(nc, h, w, block_size, x.dtype.itemsize,
                                  vmem_limit))
    if nc % nc_blk:
        raise ValueError("nc_block must divide N*C")
    grid_nc = nc // nc_blk

    seed_arr = jnp.asarray(seed, dtype=jnp.int32).reshape((1,))
    cparams = pltpu.CompilerParams(dimension_semantics=("parallel",),
                                   vmem_limit_bytes=vmem_limit)

    # ---- Pass 1: PRNG mask + separable pool; only tiny per-tile sums hit HBM.
    sum_kernel = functools.partial(_mask_sum_kernel, nc_blk=nc_blk, h=h, w=w,
                                   block_size=block_size, thresh=thresh)
    psums = pl.pallas_call(
        sum_kernel,
        out_shape=jax.ShapeDtypeStruct((grid_nc, 1, 1), jnp.float32),
        grid=(grid_nc,),
        in_specs=[pl.BlockSpec(memory_space=pltpu.MemorySpace.SMEM)],   # seed
        out_specs=pl.BlockSpec((1, 1, 1), lambda i: (i, 0, 0)),
        compiler_params=cparams,
        cost_estimate=pl.CostEstimate(flops=int(nc * hp * wp * 24),
                                      transcendentals=0,
                                      bytes_accessed=int(grid_nc * 4 + 4)),
    )(seed_arr)

    # Exact global renormalization factor (0/1 values sum exactly in f32).
    total = jnp.sum(psums)
    scale_arr = (jnp.float32(nc * h * w) / total).astype(jnp.float32).reshape((1,))

    # ---- Pass 2: regenerate mask in-kernel, apply; x read + out write only.
    x_t = x.reshape(nc, h, w)                       # contiguous -> free reshape
    apply_kernel = functools.partial(_apply_kernel, nc_blk=nc_blk, h=h, w=w,
                                     block_size=block_size, thresh=thresh)
    out = pl.pallas_call(
        apply_kernel,
        out_shape=jax.ShapeDtypeStruct((nc, h, w), x.dtype),
        grid=(grid_nc,),
        in_specs=[
            pl.BlockSpec(memory_space=pltpu.MemorySpace.SMEM),          # seed
            pl.BlockSpec(memory_space=pltpu.MemorySpace.SMEM),          # scale
            pl.BlockSpec((nc_blk, h, w), lambda i: (i, 0, 0)),          # x
        ],
        out_specs=pl.BlockSpec((nc_blk, h, w), lambda i: (i, 0, 0)),
        compiler_params=cparams,
        cost_estimate=pl.CostEstimate(
            flops=int(nc * hp * wp * 24 + nc * h * w * 3),
            transcendentals=0,
            bytes_accessed=int(2 * nc * h * w * x.dtype.itemsize + 8)),
        input_output_aliases=({2: 0} if donate_x else {}),
    )(seed_arr, scale_arr, x_t)

    return out.reshape(n, c, h, w)


def dump_mask_and_block(seed, n, c, h, w, block_size=5, p=0.1, nc_block=None):
    """Validation helper: dump (padded Bernoulli mask, mask_block)."""
    nc = n * c
    hp = h + block_size - 1
    wp = w + block_size - 1
    thresh = _gamma_threshold(w, block_size, p)
    vmem_limit = _vmem_budget_bytes()
    nc_blk = (nc_block if nc_block is not None
              else _pick_nc_block(nc, h, w, block_size, 4, vmem_limit))
    if nc % nc_blk:
        raise ValueError("nc_block must divide N*C")
    grid_nc = nc // nc_blk
    seed_arr = jnp.asarray(seed, dtype=jnp.int32).reshape((1,))
    kernel = functools.partial(_mask_dump_kernel, nc_blk=nc_blk, h=h, w=w,
                               block_size=block_size, thresh=thresh)
    mpad, mb = pl.pallas_call(
        kernel,
        out_shape=(jax.ShapeDtypeStruct((nc, hp, wp), jnp.float32),
                   jax.ShapeDtypeStruct((nc, h, w), jnp.float32)),
        grid=(grid_nc,),
        in_specs=[pl.BlockSpec(memory_space=pltpu.MemorySpace.SMEM)],
        out_specs=(pl.BlockSpec((nc_blk, hp, wp), lambda i: (i, 0, 0)),
                   pl.BlockSpec((nc_blk, h, w), lambda i: (i, 0, 0))),
        compiler_params=pltpu.CompilerParams(
            dimension_semantics=("parallel",),
            vmem_limit_bytes=vmem_limit),
    )(seed_arr)
    return mpad.reshape(n, c, hp, wp), mb.reshape(n, c, h, w)


# --------------------------------------------------------------------------
# Demo / validation
# --------------------------------------------------------------------------
if __name__ == "__main__":
    root = jax.random.PRNGKey(0)
    kx1, kx2, kseed = jax.random.split(root, 3)
    seed = jax.random.randint(kseed, (), 0, 2 ** 31 - 1, dtype=jnp.int32)

    configs = [
        # (x-key, N, C, H, W, nc_block override)
        (kx1, 2, 4, 16, 16, None),   # auto-picked tiling
        (kx2, 2, 8, 16, 16, 4),      # explicit nc_block = 4 -> 4 grid steps
    ]
    for kx, N, C, H, W, ncb in configs:
        x = jax.random.normal(kx, (N, C, H, W), dtype=jnp.float32)

        out = dropblock_forward(x, seed, block_size=5, p=0.1, training=True,
                                nc_block=ncb)
        out = jax.block_until_ready(out)
        assert out.shape == (N, C, H, W)
        assert bool(jnp.isfinite(out).all())

        # Masks are keyed on global coordinates, so the dump (possibly with a
        # different tiling) reproduces exactly what both passes generated.
        mpad, mb = dump_mask_and_block(seed, N, C, H, W, block_size=5, p=0.1,
                                       nc_block=ncb)

        # (a) End-to-end: out must equal the module's math applied to the
        #     mask_block the kernels generated (exact renormalization, and
        #     implicitly checks pass-1 / pass-2 regeneration consistency).
        ref = mb * x * (mb.size / jnp.sum(mb))
        assert jnp.allclose(out, ref, atol=1e-5, rtol=1e-5), "apply/scale mismatch"

        # (b) Pooling: the separable in-kernel OR-pool must match
        #     lax.reduce_window max-pool on the dumped zero-padded mask.
        pooled = lax.reduce_window(
            mpad, -jnp.inf, lax.max,
            window_dimensions=(1, 1, 5, 5),
            window_strides=(1, 1, 1, 1), padding="VALID")
        assert jnp.array_equal(1.0 - pooled, mb), "pooling mismatch"

        # (c) Eval mode is the identity.
        out_eval = dropblock_forward(x, seed, block_size=5, p=0.1, training=False)
        assert jnp.array_equal(out_eval, x)

    print("KERNEL_OK")
</pallas_src>

<mosaic_0001>
module attributes {stable_mosaic.version = 11 : i64} {
  func.func @_mask_sum_kernel(%arg0: i32, %arg1: memref<1xi32, #tpu.memory_space<smem>>, %arg2: memref<1x1x1xf32, #tpu.memory_space<vmem>>) attributes {dimension_semantics = [#tpu.dimension_semantics<parallel>], iteration_bounds = array<i64: 8>, scalar_prefetch = 0 : i64, scratch_operands = 0 : i64, tpu.core_type = #tpu.core_type<tc>, window_params = [{transform_indices = @transform_0, window_bounds = array<i64: 1>}, {transform_indices = @transform_1, window_bounds = array<i64: 1, 1, 1>}]} {
    %c0 = arith.constant 0 : index
    %0 = memref.load %arg1[%c0] : memref<1xi32, #tpu.memory_space<smem>>
    %1 = tpu.iota {dimensions = array<i32: 0>} : vector<20x20xi32>
    %2 = tpu.iota {dimensions = array<i32: 1>} : vector<20x20xi32>
    %c4_i32 = arith.constant 4 : i32
    %3 = vector.broadcast %c4_i32 : i32 to vector<20x20xi32>
    %4 = arith.cmpi sge, %1, %3 : vector<20x20xi32>
    %c16_i32 = arith.constant 16 : i32
    %5 = vector.broadcast %c16_i32 : i32 to vector<20x20xi32>
    %6 = arith.cmpi slt, %1, %5 : vector<20x20xi32>
    %7 = arith.andi %4, %6 : vector<20x20xi1>
    %c4_i32_0 = arith.constant 4 : i32
    %8 = vector.broadcast %c4_i32_0 : i32 to vector<20x20xi32>
    %9 = arith.cmpi sge, %2, %8 : vector<20x20xi32>
    %10 = arith.andi %7, %9 : vector<20x20xi1>
    %c16_i32_1 = arith.constant 16 : i32
    %11 = vector.broadcast %c16_i32_1 : i32 to vector<20x20xi32>
    %12 = arith.cmpi slt, %2, %11 : vector<20x20xi32>
    %13 = arith.andi %10, %12 : vector<20x20xi1>
    %c20_i32 = arith.constant 20 : i32
    %14 = vector.broadcast %c20_i32 : i32 to vector<20x20xi32>
    %15 = arith.muli %1, %14 : vector<20x20xi32>
    %16 = arith.addi %15, %2 : vector<20x20xi32>
    %17 = tpu.iota {dimensions = array<i32: 0>} : vector<1x20x20xi32>
    %c1_i32 = arith.constant 1 : i32
    %18 = arith.muli %arg0, %c1_i32 : i32
    %19 = vector.broadcast %18 : i32 to vector<1x20x20xi32>
    %20 = arith.addi %17, %19 : vector<1x20x20xi32>
    %c400_i32 = arith.constant 400 : i32
    %21 = vector.broadcast %c400_i32 : i32 to vector<1x20x20xi32>
    %22 = arith.muli %20, %21 : vector<1x20x20xi32>
    %23 = vector.shape_cast %16 : vector<20x20xi32> to vector<1x20x20xi32>
    %24 = arith.addi %22, %23 : vector<1x20x20xi32>
    %c-1640531527_i32 = arith.constant -1640531527 : i32
    %25 = arith.muli %0, %c-1640531527_i32 : i32
    %26 = vector.broadcast %25 : i32 to vector<1x20x20xi32>
    %27 = arith.xori %24, %26 : vector<1x20x20xi32>
    %c16_i32_2 = arith.constant 16 : i32
    %28 = vector.broadcast %c16_i32_2 : i32 to vector<1x20x20xi32>
    %29 = arith.shrui %27, %28 : vector<1x20x20xi32>
    %30 = arith.xori %27, %29 : vector<1x20x20xi32>
    %c2146121005_i32 = arith.constant 2146121005 : i32
    %31 = vector.broadcast %c2146121005_i32 : i32 to vector<1x20x20xi32>
    %32 = arith.muli %30, %31 : vector<1x20x20xi32>
    %c15_i32 = arith.constant 15 : i32
    %33 = vector.broadcast %c15_i32 : i32 to vector<1x20x20xi32>
    %34 = arith.shrui %32, %33 : vector<1x20x20xi32>
    %35 = arith.xori %32, %34 : vector<1x20x20xi32>
    %c-2073254261_i32 = arith.constant -2073254261 : i32
    %36 = vector.broadcast %c-2073254261_i32 : i32 to vector<1x20x20xi32>
    %37 = arith.muli %35, %36 : vector<1x20x20xi32>
    %c16_i32_3 = arith.constant 16 : i32
    %38 = vector.broadcast %c16_i32_3 : i32 to vector<1x20x20xi32>
    %39 = arith.shrui %37, %38 : vector<1x20x20xi32>
    %40 = arith.xori %37, %39 : vector<1x20x20xi32>
    %41 = vector.broadcast %0 : i32 to vector<1x20x20xi32>
    %42 = arith.addi %40, %41 : vector<1x20x20xi32>
    %c16_i32_4 = arith.constant 16 : i32
    %43 = vector.broadcast %c16_i32_4 : i32 to vector<1x20x20xi32>
    %44 = arith.shrui %42, %43 : vector<1x20x20xi32>
    %45 = arith.xori %42, %44 : vector<1x20x20xi32>
    %c2146121005_i32_5 = arith.constant 2146121005 : i32
    %46 = vector.broadcast %c2146121005_i32_5 : i32 to vector<1x20x20xi32>
    %47 = arith.muli %45, %46 : vector<1x20x20xi32>
    %c15_i32_6 = arith.constant 15 : i32
    %48 = vector.broadcast %c15_i32_6 : i32 to vector<1x20x20xi32>
    %49 = arith.shrui %47, %48 : vector<1x20x20xi32>
    %50 = arith.xori %47, %49 : vector<1x20x20xi32>
    %c-2073254261_i32_7 = arith.constant -2073254261 : i32
    %51 = vector.broadcast %c-2073254261_i32_7 : i32 to vector<1x20x20xi32>
    %52 = arith.muli %50, %51 : vector<1x20x20xi32>
    %c16_i32_8 = arith.constant 16 : i32
    %53 = vector.broadcast %c16_i32_8 : i32 to vector<1x20x20xi32>
    %54 = arith.shrui %52, %53 : vector<1x20x20xi32>
    %55 = arith.xori %52, %54 : vector<1x20x20xi32>
    %c1_i32_9 = arith.constant 1 : i32
    %56 = vector.broadcast %c1_i32_9 : i32 to vector<1x20x20xi32>
    %57 = arith.shrui %55, %56 : vector<1x20x20xi32>
    %c137438953_i32 = arith.constant 137438953 : i32
    %58 = vector.broadcast %c137438953_i32 : i32 to vector<1x20x20xi32>
    %59 = arith.cmpi slt, %57, %58 : vector<1x20x20xi32>
    %60 = vector.shape_cast %13 : vector<20x20xi1> to vector<1x20x20xi1>
    %61 = arith.andi %59, %60 : vector<1x20x20xi1>
    %62 = vector.extract_strided_slice %61 {offsets = [0, 0, 0], sizes = [1, 20, 16], strides = [1, 1, 1]} : vector<1x20x20xi1> to vector<1x20x16xi1>
    %63 = vector.extract_strided_slice %61 {offsets = [0, 0, 1], sizes = [1, 20, 16], strides = [1, 1, 1]} : vector<1x20x20xi1> to vector<1x20x16xi1>
    %64 = arith.ori %62, %63 : vector<1x20x16xi1>
    %65 = vector.extract_strided_slice %61 {offsets = [0, 0, 2], sizes = [1, 20, 16], strides = [1, 1, 1]} : vector<1x20x20xi1> to vector<1x20x16xi1>
    %66 = arith.ori %64, %65 : vector<1x20x16xi1>
    %67 = vector.extract_strided_slice %61 {offsets = [0, 0, 3], sizes = [1, 20, 16], strides = [1, 1, 1]} : vector<1x20x20xi1> to vector<1x20x16xi1>
    %68 = arith.ori %66, %67 : vector<1x20x16xi1>
    %69 = vector.extract_strided_slice %61 {offsets = [0, 0, 4], sizes = [1, 20, 16], strides = [1, 1, 1]} : vector<1x20x20xi1> to vector<1x20x16xi1>
    %70 = arith.ori %68, %69 : vector<1x20x16xi1>
    %71 = vector.extract_strided_slice %70 {offsets = [0, 0, 0], sizes = [1, 16, 16], strides = [1, 1, 1]} : vector<1x20x16xi1> to vector<1x16x16xi1>
    %72 = vector.extract_strided_slice %70 {offsets = [0, 1, 0], sizes = [1, 16, 16], strides = [1, 1, 1]} : vector<1x20x16xi1> to vector<1x16x16xi1>
    %73 = arith.ori %71, %72 : vector<1x16x16xi1>
    %74 = vector.extract_strided_slice %70 {offsets = [0, 2, 0], sizes = [1, 16, 16], strides = [1, 1, 1]} : vector<1x20x16xi1> to vector<1x16x16xi1>
    %75 = arith.ori %73, %74 : vector<1x16x16xi1>
    %76 = vector.extract_strided_slice %70 {offsets = [0, 3, 0], sizes = [1, 16, 16], strides = [1, 1, 1]} : vector<1x20x16xi1> to vector<1x16x16xi1>
    %77 = arith.ori %75, %76 : vector<1x16x16xi1>
    %78 = vector.extract_strided_slice %70 {offsets = [0, 4, 0], sizes = [1, 16, 16], strides = [1, 1, 1]} : vector<1x20x16xi1> to vector<1x16x16xi1>
    %79 = arith.ori %77, %78 : vector<1x16x16xi1>
    %cst = arith.constant 0.000000e+00 : f32
    %cst_10 = arith.constant 1.000000e+00 : f32
    %80 = vector.broadcast %cst : f32 to vector<1x16x16xf32>
    %81 = vector.broadcast %cst_10 : f32 to vector<1x16x16xf32>
    %82 = arith.select %79, %80, %81 : vector<1x16x16xi1>, vector<1x16x16xf32>
    %83 = vector.shape_cast %82 : vector<1x16x16xf32> to vector<1x1x16x16xf32>
    %cst_11 = arith.constant dense<0.000000e+00> : vector<1xf32>
    %84 = vector.multi_reduction <add>, %83, %cst_11 [1, 2, 3] : vector<1x1x16x16xf32> to vector<1xf32>
    %85 = vector.shape_cast %84 : vector<1xf32> to vector<1x1x1x1xf32>
    %86 = vector.extract %85[0, 0, 0, 0] : f32 from vector<1x1x1x1xf32>
    %87 = vector.broadcast %86 : f32 to vector<1x1x1xf32>
    %c0_12 = arith.constant 0 : index
    %c0_13 = arith.constant 0 : index
    %c0_14 = arith.constant 0 : index
    %88 = vector.load %arg2[%c0_12, %c0_13, %c0_14] : memref<1x1x1xf32, #tpu.memory_space<vmem>>, vector<1x1x1xf32>
    tpu.vector_store %arg2[%c0_12, %c0_13, %c0_14], %87 {strides = array<i32>} : memref<1x1x1xf32, #tpu.memory_space<vmem>>, vector<1x1x1xf32>,
    return
  }
  func.func @transform_0(%arg0: i32) -> i32 {
    %c0_i32 = arith.constant 0 : i32
    %c0_i32_0 = arith.constant 0 : i32
    return %c0_i32 : i32
  }
  func.func @transform_1(%arg0: i32) -> (i32, i32, i32) {
    %c0_i32 = arith.constant 0 : i32
    %c0_i32_0 = arith.constant 0 : i32
    %c0_i32_1 = arith.constant 0 : i32
    return %arg0, %c0_i32, %c0_i32_0 : i32, i32, i32
  }
}

</mosaic_0001>

<llo_original>
// kernel: tpu_custom_call.1
$region0: #{tpu_custom_call.1}
  #allocation0 [shape = 'u32[]', space=smem, size = 0x4, offset = 0x4, fixed_abs, tag = 'smem constant byte address 0x4 - core index']
  #allocation1 [shape = 'u32[144,128]{1,0:T(1,128)}', space=vmem, size = 0x12000, scoped, tag = 'internal scratch']
  #allocation2 [shape = 's32[1]{0:T(128)S(6)}', space=smem, size = 0x200, scoped, tag = 'scoped memory for tpu_custom_call.1']
  %s0 = inlined_call_operand.<no memory space> [shape: s32[1], index: 0, kind: input, shape index: {}]
  %s1 = inlined_call_operand.vmem [shape: f32[8,1,1], index: 1, kind: output, shape index: {}]
  %s2 = sld [smem:[#allocation0]]
  $region37: #{tpu_custom_call.1} parent=0
    _
  %s4 = ssub.s32 1, %s2
  %s5 = scalar_select 0, %s4, %s2
  %6 = sst [smem:[#allocation2]] %s0
  loop: start=0, step=1, limit=10
  $region2: #{tpu_custom_call.1} parent=0 // loop_pre_header
    _
  $region3: #{tpu_custom_call.1} parent=0 // loop_header
    %s8 = sphi 0, %s12
    %p9 = scmp.ge.s32.totalorder %s8, 10
    %s16 = sphi 0, %s16
    %s18 = sphi 0, %s16
    %s19 = sphi 0, %s18
    %s33 = sphi 0, %s19
    %s39 = sphi 0, %s41
    %s42 = sphi 0, %s39
    %s43 = sphi 0, %s42
    %s59 = sphi 0, %s43
  $region4: #{tpu_custom_call.1} parent=0 // loop_header_branch
    %11 = sbr.rel (%p9) target = $region8
  $region5: #{tpu_custom_call.1} parent=0 // loop_body
    %s13 = ssub.s32 %s8, 1
    %s14 = ssub.s32 %s8, 2
    %s15 = sadd.s32 %s8, 1
    %s17 = sadd.s32 %s16, 1
    %p20 = scmp.eq.s32.totalorder %s8, 7
    %p21 = scmp.ne.s32.totalorder %s16, %s18
    %p22 = scmp.eq.s32.totalorder %s8, 0
    %p23 = por %p21, %p22
    %p24 = scmp.ne.s32.totalorder %s16, %s18
    %p25 = scmp.eq.s32.totalorder %s13, 7
    %p26 = por %p24, %p25
    %p27 = scmp.ne.s32.totalorder %s18, %s19
    %p28 = scmp.eq.s32.totalorder %s13, 0
    %p29 = por %p27, %p28
    %p30 = scmp.ne.s32.totalorder %s18, %s19
    %p31 = scmp.eq.s32.totalorder %s14, 7
    %p32 = por %p30, %p31
    %p34 = scmp.ne.s32.totalorder %s19, %s33
    %p35 = scmp.eq.s32.totalorder %s14, 0
    %p36 = por %p34, %p35
    %s37 = ssub.s32 %s8, %s15
    %p38 = scmp.eq.s32.totalorder %s37, 0
    %s40 = sadd.s32 %s39, 1
    %s41 = scalar_select %p38, %s39, %s40
    %p44 = pneg %p38
    %p45 = scmp.eq.s32.totalorder %s8, 7
    %p46 = por %p44, %p45
    %p47 = scmp.ne.s32.totalorder %s39, %s42
    %p48 = scmp.eq.s32.totalorder %s8, 0
    %p49 = por %p47, %p48
    %p50 = scmp.ne.s32.totalorder %s39, %s42
    %p51 = scmp.eq.s32.totalorder %s13, 7
    %p52 = por %p50, %p51
    %p53 = scmp.ne.s32.totalorder %s42, %s43
    %p54 = scmp.eq.s32.totalorder %s13, 0
    %p55 = por %p53, %p54
    %p56 = scmp.ne.s32.totalorder %s42, %s43
    %p57 = scmp.eq.s32.totalorder %s14, 7
    %p58 = por %p56, %p57
    %p60 = scmp.ne.s32.totalorder %s43, %s59
    %p61 = scmp.eq.s32.totalorder %s14, 0
    %p62 = por %p60, %p61
    %p63 = scmp.le.s32.totalorder 1, %s8
    %p64 = scmp.lt.s32.totalorder %s8, 9
    %p65 = pnand %p63, %p64
    %p66 = pneg %p65
    // Predicated region
    $region9: #{tpu_custom_call.1} parent=5 // pred_check
      _
    $region10: #{tpu_custom_call.1} parent=5 // pred_check_branch
      %68 = sbr.rel (%p65) target = $region12
    $region11: #{tpu_custom_call.1} parent=5 // pred_region
      %s69 = ssub.s32 %s8, 1
      // Predicated region
      $region13: #{tpu_custom_call.1} parent=11 // pred_check
        %p70 = pneg %p29
      $region14: #{tpu_custom_call.1} parent=11 // pred_check_branch
        %72 = sbr.rel (%p70) target = $region16
      $region15: #{tpu_custom_call.1} parent=11 // pred_region
        _
      $region16: #{tpu_custom_call.1} parent=11 // pred_fallthru
        _
    $region12: #{tpu_custom_call.1} parent=5 // pred_fallthru
      _
    %p73 = scmp.lt.s32.totalorder %s8, 8
    // Predicated region
    $region17: #{tpu_custom_call.1} parent=5 // pred_check
      %p74 = pneg %p73
    $region18: #{tpu_custom_call.1} parent=5 // pred_check_branch
      %76 = sbr.rel (%p74) target = $region20
    $region19: #{tpu_custom_call.1} parent=5 // pred_region
      _
    $region20: #{tpu_custom_call.1} parent=5 // pred_fallthru
      _
    %p77 = scmp.le.s32.totalorder 1, %s8
    %p78 = scmp.lt.s32.totalorder %s8, 9
    %p79 = pnand %p77, %p78
    %p80 = pneg %p79
    // Predicated region
    $region21: #{tpu_custom_call.1} parent=5 // pred_check
      _
    $region22: #{tpu_custom_call.1} parent=5 // pred_check_branch
      %82 = sbr.rel (%p79) target = $region24
    $region23: #{tpu_custom_call.1} parent=5 // pred_region
      %s83 = ssub.s32 %s8, 1
      %p84 = pneg %p29
      %p85 = pneg %p26
      %p86 = pneg %p55
      %p87 = pneg %p52
      %p88 = scmp.lt.s32.totalorder %s13, 7
      %s89 = scalar_select %p88, %s13, 7
      %s90 = scalar_lea.vmem %s1, %s89
      %p91 = scmp.lt.s32.totalorder %s13, 7
      %s92 = scalar_select %p91, %s13, 7
      %s93 = scalar_lea.vmem %s1, %s92
      %s94 = sld [smem:[#allocation2]]
      %v95 = vlaneseq
      %v96 = vshrl.u32 %v95, 7
      %v97 = vadd.s32 %v96, 8
      %v98 = vadd.s32 %v96, 16
      %v99 = vlaneseq
      %v100 = vand.u32 %v99, 127
      %vm101 = vcmp.ge.s32.totalorder %v96, 4
      %vm102 = vcmp.ge.s32.totalorder %v97, 4
      %vm103 = vcmp.ge.s32.totalorder %v98, 4
      %vm104 = vcmp.lt.s32.totalorder %v96, 16
      %vm105 = vcmp.lt.s32.totalorder %v97, 16
      %vm106 = vcmp.lt.s32.totalorder %v98, 16
      %vm107 = vmand %vm101, %vm104
      %vm108 = vmand %vm102, %vm105
      %vm109 = vmand %vm103, %vm106
      %vm110 = vcmp.ge.s32.totalorder %v100, 4
      %vm111 = vmand %vm107, %vm110
      %vm112 = vmand %vm108, %vm110
      %vm113 = vmand %vm109, %vm110
      %vm114 = vcmp.lt.s32.totalorder %v100, 16
      %vm115 = vmand %vm111, %vm114
      %vm116 = vmand %vm112, %vm114
      %vm117 = vmand %vm113, %vm114
      %v118 = vmul.u32 %v96, 20
      %v119 = vmul.u32 %v97, 20
      %v120 = vmul.u32 %v98, 20
      %v121 = vadd.s32 %v118, %v100
      %v122 = vadd.s32 %v119, %v100
      %v123 = vadd.s32 %v120, %v100
      %v124 = vstv %s13
      %v125 = vmul.u32 %v124, 400
      %v126 = vadd.s32 %v125, %v121
      %v127 = vadd.s32 %v125, %v122
      %v128 = vadd.s32 %v125, %v123
      %s129 = smul.u32 %s94, 2654435769
      %v130 = vstv %s129
      %v131 = vxor.u32 %v126, %v130
      %v132 = vxor.u32 %v127, %v130
      %v133 = vxor.u32 %v128, %v130
      %v134 = vshrl.u32 %v131, 16
      %v135 = vshrl.u32 %v132, 16
      %v136 = vshrl.u32 %v133, 16
      %v137 = vxor.u32 %v131, %v134
      %v138 = vxor.u32 %v132, %v135
      %v139 = vxor.u32 %v133, %v136
      %v140 = vmul.u32 %v137, 2146121005
      %v141 = vmul.u32 %v138, 2146121005
      %v142 = vmul.u32 %v139, 2146121005
      %v143 = vshrl.u32 %v140, 15
      %v144 = vshrl.u32 %v141, 15
      %v145 = vshrl.u32 %v142, 15
      %v146 = vxor.u32 %v140, %v143
      %v147 = vxor.u32 %v141, %v144
      %v148 = vxor.u32 %v142, %v145
      %v149 = vmul.u32 %v146, 2221713035
      %v150 = vmul.u32 %v147, 2221713035
      %v151 = vmul.u32 %v148, 2221713035
      %v152 = vshrl.u32 %v149, 16
      %v153 = vshrl.u32 %v150, 16
      %v154 = vshrl.u32 %v151, 16
      %v155 = vxor.u32 %v149, %v152
      %v156 = vxor.u32 %v150, %v153
      %v157 = vxor.u32 %v151, %v154
      %v158 = vstv %s94
      %v159 = vadd.s32 %v155, %v158
      %v160 = vadd.s32 %v156, %v158
      %v161 = vadd.s32 %v157, %v158
      %v162 = vshrl.u32 %v159, 16
      %v163 = vshrl.u32 %v160, 16
      %v164 = vshrl.u32 %v161, 16
      %v165 = vxor.u32 %v159, %v162
      %v166 = vxor.u32 %v160, %v163
      %v167 = vxor.u32 %v161, %v164
      %v168 = vmul.u32 %v165, 2146121005
      %v169 = vmul.u32 %v166, 2146121005
      %v170 = vmul.u32 %v167, 2146121005
      %v171 = vshrl.u32 %v168, 15
      %v172 = vshrl.u32 %v169, 15
      %v173 = vshrl.u32 %v170, 15
      %v174 = vxor.u32 %v168, %v171
      %v175 = vxor.u32 %v169, %v172
      %v176 = vxor.u32 %v170, %v173
      %v177 = vmul.u32 %v174, 2221713035
      %v178 = vmul.u32 %v175, 2221713035
      %v179 = vmul.u32 %v176, 2221713035
      %v180 = vshrl.u32 %v177, 16
      %v181 = vshrl.u32 %v178, 16
      %v182 = vshrl.u32 %v179, 16
      %v183 = vxor.u32 %v177, %v180
      %v184 = vxor.u32 %v178, %v181
      %v185 = vxor.u32 %v179, %v182
      %v186 = vshrl.u32 %v183, 1
      %v187 = vshrl.u32 %v184, 1
      %v188 = vshrl.u32 %v185, 1
      %vm189 = vcmp.lt.s32.totalorder %v186, 137438953
      %vm190 = vcmp.lt.s32.totalorder %v187, 137438953
      %vm191 = vcmp.lt.s32.totalorder %v188, 137438953
      %vm192 = vmand %vm189, %vm115
      %vm193 = vmand %vm190, %vm116
      %vm194 = vmand %vm191, %vm117
      %v195 = vsel %vm192, 1, 0
      %v196 = vsel %vm193, 1, 0
      %v197 = vsel %vm194, 1, 0
      %198 = vrot.lane.b32.xlu0 %v195, 127
      %v199 = vpop.permute.xlu0 %198
      %200 = vrot.lane.b32.xlu0 %v196, 127
      %v201 = vpop.permute.xlu0 %200
      %202 = vrot.lane.b32.xlu0 %v197, 127
      %v203 = vpop.permute.xlu0 %202
      %vm204 = vcmp.ne.s32.totalorder %v199, 0
      %vm205 = vcmp.ne.s32.totalorder %v201, 0
      %vm206 = vcmp.ne.s32.totalorder %v203, 0
      %vm207 = vmor %vm192, %vm204
      %vm208 = vmor %vm193, %vm205
      %vm209 = vmor %vm194, %vm206
      %210 = vrot.lane.b32.xlu0 %v195, 126
      %v211 = vpop.permute.xlu0 %210
      %212 = vrot.lane.b32.xlu0 %v196, 126
      %v213 = vpop.permute.xlu0 %212
      %214 = vrot.lane.b32.xlu0 %v197, 126
      %v215 = vpop.permute.xlu0 %214
      %vm216 = vcmp.ne.s32.totalorder %v211, 0
      %vm217 = vcmp.ne.s32.totalorder %v213, 0
      %vm218 = vcmp.ne.s32.totalorder %v215, 0
      %vm219 = vmor %vm207, %vm216
      %vm220 = vmor %vm208, %vm217
      %vm221 = vmor %vm209, %vm218
      %222 = vrot.lane.b32.xlu0 %v195, 125
      %v223 = vpop.permute.xlu0 %222
      %224 = vrot.lane.b32.xlu0 %v196, 125
      %v225 = vpop.permute.xlu0 %224
      %226 = vrot.lane.b32.xlu0 %v197, 125
      %v227 = vpop.permute.xlu0 %226
      %vm228 = vcmp.ne.s32.totalorder %v223, 0
      %vm229 = vcmp.ne.s32.totalorder %v225, 0
      %vm230 = vcmp.ne.s32.totalorder %v227, 0
      %vm231 = vmor %vm219, %vm228
      %vm232 = vmor %vm220, %vm229
      %vm233 = vmor %vm221, %vm230
      %234 = vrot.lane.b32.xlu0 %v195, 124
      %v235 = vpop.permute.xlu0 %234
      %236 = vrot.lane.b32.xlu0 %v196, 124
      %v237 = vpop.permute.xlu0 %236
      %238 = vrot.lane.b32.xlu0 %v197, 124
      %v239 = vpop.permute.xlu0 %238
      %vm240 = vcmp.ne.s32.totalorder %v235, 0
      %vm241 = vcmp.ne.s32.totalorder %v237, 0
      %vm242 = vcmp.ne.s32.totalorder %v239, 0
      %vm243 = vmor %vm231, %vm240
      %vm244 = vmor %vm232, %vm241
      %vm245 = vmor %vm233, %vm242
      %v246 = vsel %vm243, 1, 0
      %v247 = vsel %vm244, 1, 0
      %v248 = vsel %vm245, 1, 0
      %vm249 = vcmask 1046528
      %v250 = vrot.slane %v246, 1
      %v251 = vrot.slane %v247, 1
      %v252 = vsel %vm249, %v250, %v251
      %v253 = vrot.slane %v248, 1
      %v254 = vsel %vm249, %v251, %v253
      %vm255 = vcmp.ne.s32.totalorder %v252, 0
      %vm256 = vcmp.ne.s32.totalorder %v254, 0
      %vm257 = vmor %vm243, %vm255
      %vm258 = vmor %vm244, %vm256
      %vm259 = vcmask 1045504
      %v260 = vrot.slane %v246, 2
      %v261 = vrot.slane %v247, 2
      %v262 = vsel %vm259, %v260, %v261
      %v263 = vrot.slane %v248, 2
      %v264 = vsel %vm259, %v261, %v263
      %vm265 = vcmp.ne.s32.totalorder %v262, 0
      %vm266 = vcmp.ne.s32.totalorder %v264, 0
      %vm267 = vmor %vm257, %vm265
      %vm268 = vmor %vm258, %vm266
      %vm269 = vcmask 1044480
      %v270 = vrot.slane %v246, 3
      %v271 = vrot.slane %v247, 3
      %v272 = vsel %vm269, %v270, %v271
      %v273 = vrot.slane %v248, 3
      %v274 = vsel %vm269, %v271, %v273
      %vm275 = vcmp.ne.s32.totalorder %v272, 0
      %vm276 = vcmp.ne.s32.totalorder %v274, 0
      %vm277 = vmor %vm267, %vm275
      %vm278 = vmor %vm268, %vm276
      %vm279 = vcmask 1043456
      %v280 = vrot.slane %v246, 4
      %v281 = vrot.slane %v247, 4
      %v282 = vsel %vm279, %v280, %v281
      %v283 = vrot.slane %v248, 4
      %v284 = vsel %vm279, %v281, %v283
      %vm285 = vcmp.ne.s32.totalorder %v282, 0
      %vm286 = vcmp.ne.s32.totalorder %v284, 0
      %vm287 = vmor %vm277, %vm285
      %vm288 = vmor %vm278, %vm286
      %v289 = vsel %vm287, 0.0, 1.0
      %v290 = vsel %vm288, 0.0, 1.0
      %vm291 = vcmask 130048
      %v292 = vsel %vm291, %v289, 0.0
      %v293 = vsel %vm291, %v290, 0.0
      %v294 = vadd.f32 %v292, %v293
      %295 = vadd.xlane.f32.xlu0 %v294
      %v296 = vpop.xlane.xlu0 %295
      %v297 = vrot.slane %v296, 4
      %v298 = vadd.f32 %v296, %v297
      %v299 = vrot.slane %v298, 2
      %v300 = vadd.f32 %v298, %v299
      %v301 = vrot.slane %v300, 1
      %v302 = vadd.f32 %v300, %v301
      %s303 = vtos %v302
      %v304 = vstv %s303
      %vm305 = vcmask 0
      %306 = vst.msk [vmem:[%s93] sm:$0x1] %vm305, %v304
      %p307 = scmp.lt.s32.totalorder %s13, 7
      %s308 = scalar_select %p307, %s13, 7
      %s309 = scalar_lea.vmem %s1, %s308
      // Predicated region
      $region25: #{tpu_custom_call.1} parent=23 // pred_check
        %p310 = pneg %p52
      $region26: #{tpu_custom_call.1} parent=23 // pred_check_branch
        %312 = sbr.rel (%p310) target = $region28
      $region27: #{tpu_custom_call.1} parent=23 // pred_region
        _
      $region28: #{tpu_custom_call.1} parent=23 // pred_fallthru
        _
    $region24: #{tpu_custom_call.1} parent=5 // pred_fallthru
      _
    %p313 = scmp.le.s32.totalorder 2, %s8
    // Predicated region
    $region29: #{tpu_custom_call.1} parent=5 // pred_check
      %p314 = pneg %p313
    $region30: #{tpu_custom_call.1} parent=5 // pred_check_branch
      %316 = sbr.rel (%p314) target = $region32
    $region31: #{tpu_custom_call.1} parent=5 // pred_region
      %s317 = ssub.s32 %s8, 2
      // Predicated region
      $region33: #{tpu_custom_call.1} parent=31 // pred_check
        %p318 = pneg %p58
      $region34: #{tpu_custom_call.1} parent=31 // pred_check_branch
        %320 = sbr.rel (%p318) target = $region36
      $region35: #{tpu_custom_call.1} parent=31 // pred_region
        %p321 = scmp.lt.s32.totalorder %s14, 7
        %s322 = scalar_select %p321, %s14, 7
        %s323 = scalar_lea.vmem %s1, %s322
      $region36: #{tpu_custom_call.1} parent=31 // pred_fallthru
        _
    $region32: #{tpu_custom_call.1} parent=5 // pred_fallthru
      _
  $region6: #{tpu_custom_call.1} parent=0 // loop_footer
    %s12 = sadd.s32 1, %s8
  $region7: #{tpu_custom_call.1} parent=0 // loop_footer_branch
    %7 = sbr.rel target = $region3
  $region8: #{tpu_custom_call.1} parent=0 // loop_exit
    _

</llo_original>
